<compile_context>
chip_gen: v5e
topology: v5e:2x2
jax: 0.10.0
libtpu: 0.0.40
codegen_flags: <defaults>
</compile_context>

<pallas_src>
import functools

import jax
import jax.numpy as jnp
from jax.experimental import pallas as pl
from jax.experimental.pallas import tpu as pltpu


def _focus_kernel(x_ref, w_ref, shift_ref, o_ref):
    """One spatial tile of one batch element.

    x_ref:     (K, TS)    compute_dtype  space-to-depth activations (lane = spatial)
    w_ref:     (C2p, K)   compute_dtype  1x1 conv weight with BN scale folded in
    shift_ref: (C2p, 1)   f32            folded BN shift
    o_ref:     (C2p, TS)  f32
    """
    # MXU matmul with f32 accumulation.
    y = jnp.dot(w_ref[...], x_ref[...], preferred_element_type=jnp.float32)
    y = y + shift_ref[...]  # fused BatchNorm (eval) shift
    # SiLU: y * sigmoid(y); exp + approx reciprocal both go to the EUP slot.
    sig = pl.reciprocal(1.0 + jnp.exp(-y), approx=True)
    o_ref[...] = (y * sig).astype(o_ref.dtype)


def focus_forward(x, weight, gamma, beta, running_mean, running_var,
                  eps=1e-5, spatial_tile=4096, compute_dtype=jnp.bfloat16):
    """Focus forward: space-to-depth + 1x1 Conv (no bias) + BatchNorm (eval) + SiLU.

    x:      (B, C1, H, W) float32 NCHW (H, W even).
    weight: (C2, 4*C1) -- 1x1 conv kernel with the trailing 1x1 dims squeezed.
    Returns (B, C2, H//2, W//2) float32 NCHW.
    """
    B, C1, H, W = x.shape
    assert H % 2 == 0 and W % 2 == 0, "Focus requires even H and W"
    C2 = weight.shape[0]
    K = 4 * C1
    H2, W2 = H // 2, W // 2
    S = H2 * W2

    # --- space-to-depth (matches torch.cat order exactly). Stays in NCHW so the
    # per-batch flattened layout is already (K, spatial) -- no transposes needed.
    # TODO(synk): fold these strided slices into in-kernel strided DMAs
    # (memory_space=pl.ANY) to remove this one remaining host-side copy pass.
    x_cat = jnp.concatenate(
        (x[..., ::2, ::2], x[..., 1::2, ::2], x[..., ::2, 1::2], x[..., 1::2, 1::2]),
        axis=1,
    )  # (B, K, H2, W2)
    x_mat = x_cat.reshape(B, K, S).astype(compute_dtype)

    # --- fold BatchNorm (eval semantics) into per-channel weight scale + shift.
    scale = gamma / jnp.sqrt(running_var + eps)                       # (C2,)
    w_fold = (weight * scale[:, None]).astype(compute_dtype)          # (C2, K)
    shift = (beta - running_mean * scale).reshape(C2, 1).astype(jnp.float32)

    # --- pad C2 to a multiple of 8 so the output tile is sublane-aligned for any
    # channel count (weight/shift padding is tiny and folds into the jit).
    C2p = ((C2 + 7) // 8) * 8
    if C2p != C2:
        w_fold = jnp.pad(w_fold, ((0, C2p - C2), (0, 0)))
        shift = jnp.pad(shift, ((0, C2p - C2), (0, 0)))

    # --- lane-dense spatial tiling: tile width multiple of 128, pad spatial axis.
    s_lane = ((S + 127) // 128) * 128
    ts = min(max(128, (spatial_tile // 128) * 128), s_lane)
    s_pad = pl.cdiv(S, ts) * ts
    if s_pad != S:
        x_mat = jnp.pad(x_mat, ((0, 0), (0, 0), (0, s_pad - S)))
    n_s = s_pad // ts

    out = pl.pallas_call(
        _focus_kernel,
        out_shape=jax.ShapeDtypeStruct((B, C2p, s_pad), jnp.float32),
        grid_spec=pltpu.PrefetchScalarGridSpec(
            num_scalar_prefetch=0,
            grid=(B, n_s),
            in_specs=[
                pl.BlockSpec((pl.Squeezed(), K, ts), lambda b, s: (b, 0, s)),
                pl.BlockSpec((C2p, K), lambda b, s: (0, 0)),
                pl.BlockSpec((C2p, 1), lambda b, s: (0, 0)),
            ],
            out_specs=pl.BlockSpec((pl.Squeezed(), C2p, ts), lambda b, s: (b, 0, s)),
        ),
        compiler_params=pltpu.CompilerParams(
            dimension_semantics=("parallel", "parallel"),
            vmem_limit_bytes=32 * 1024 * 1024,
        ),
    )(x_mat, w_fold, shift)

    out = out[:, :C2, :S]
    return out.reshape(B, C2, H2, W2)


def reference_forward(x, weight, gamma, beta, running_mean, running_var, eps=1e-5):
    """Pure-JAX f32 reference of the same forward pass."""
    x_cat = jnp.concatenate(
        (x[..., ::2, ::2], x[..., 1::2, ::2], x[..., ::2, 1::2], x[..., 1::2, 1::2]),
        axis=1,
    )
    y = jnp.einsum("bchw,oc->bohw", x_cat, weight)
    scale = gamma / jnp.sqrt(running_var + eps)
    shift = beta - running_mean * scale
    y = y * scale[None, :, None, None] + shift[None, :, None, None]
    return y * jax.nn.sigmoid(y)


if __name__ == "__main__":
    # Focus(c1=4, c2=8, k=1) -- 1x1 conv, stride 1, pad 0 (autopad(1) = 0)
    B, C1, H, W = 2, 4, 16, 16
    C2 = 8
    key = jax.random.PRNGKey(0)
    kx, kw, kg, kb, km, kv = jax.random.split(key, 6)

    x = jax.random.normal(kx, (B, C1, H, W), dtype=jnp.float32)

    # Conv2d weight has shape (C2, 4*C1, 1, 1) -> squeezed to (C2, 4*C1).
    weight = jax.random.normal(kw, (C2, 4 * C1), dtype=jnp.float32) * 0.1
    gamma = 1.0 + 0.1 * jax.random.normal(kg, (C2,), dtype=jnp.float32)
    beta = 0.1 * jax.random.normal(kb, (C2,), dtype=jnp.float32)
    running_mean = 0.1 * jax.random.normal(km, (C2,), dtype=jnp.float32)
    running_var = jnp.abs(1.0 + 0.1 * jax.random.normal(kv, (C2,), dtype=jnp.float32))

    # jit the full forward so the host-side space-to-depth / pad / cast fuse
    # into a single copy pass around the Pallas call.
    fwd = jax.jit(functools.partial(focus_forward, spatial_tile=4096,
                                    compute_dtype=jnp.bfloat16))
    out = fwd(x, weight, gamma, beta, running_mean, running_var)
    out = jax.block_until_ready(out)

    ref = reference_forward(x, weight, gamma, beta, running_mean, running_var)
    assert out.shape == (B, C2, H // 2, W // 2), out.shape
    assert bool(jnp.all(jnp.isfinite(out)))
    # bf16 inputs + approx reciprocal => bf16-level tolerance vs. the f32 reference.
    assert jnp.allclose(out, ref, atol=2e-2, rtol=2e-2), float(jnp.max(jnp.abs(out - ref)))

    print("KERNEL_OK")
</pallas_src>

<mosaic_0001>
module attributes {stable_mosaic.version = 11 : i64} {
  func.func @_focus_kernel(%arg0: i32, %arg1: i32, %arg2: memref<1x16x128xbf16, #tpu.memory_space<vmem>>, %arg3: memref<8x16xbf16, #tpu.memory_space<vmem>>, %arg4: memref<8x1xf32, #tpu.memory_space<vmem>>, %arg5: memref<1x8x128xf32, #tpu.memory_space<vmem>>) attributes {dimension_semantics = [#tpu.dimension_semantics<parallel>, #tpu.dimension_semantics<parallel>], iteration_bounds = array<i64: 2, 1>, scalar_prefetch = 0 : i64, scratch_operands = 0 : i64, tpu.core_type = #tpu.core_type<tc>, window_params = [{transform_indices = @transform_0, window_bounds = array<i64: 1, 16, 128>}, {pipeline_mode = #tpu.pipeline_mode<synchronous>, transform_indices = @transform_1, window_bounds = array<i64: 8, 16>}, {pipeline_mode = #tpu.pipeline_mode<synchronous>, transform_indices = @transform_2, window_bounds = array<i64: 8, 1>}, {transform_indices = @transform_3, window_bounds = array<i64: 1, 8, 128>}]} {
    %c0 = arith.constant 0 : index
    %c0_0 = arith.constant 0 : index
    %0 = vector.load %arg3[%c0, %c0_0] : memref<8x16xbf16, #tpu.memory_space<vmem>>, vector<8x16xbf16>
    %c0_1 = arith.constant 0 : index
    %c0_2 = arith.constant 0 : index
    %c0_3 = arith.constant 0 : index
    %1 = vector.load %arg2[%c0_1, %c0_2, %c0_3] : memref<1x16x128xbf16, #tpu.memory_space<vmem>>, vector<1x16x128xbf16>
    %2 = vector.shape_cast %1 : vector<1x16x128xbf16> to vector<16x128xbf16>
    %cst = arith.constant dense<0.000000e+00> : vector<8x128xf32>
    %3 = tpu.matmul %0, %2, %cst {dimension_numbers = #tpu.dot_dimension_numbers<[1], [0], [0], [1], [0, 0, 1, 1], [], []>} : vector<8x16xbf16>, vector<16x128xbf16>, vector<8x128xf32> -> vector<8x128xf32>
    %c0_4 = arith.constant 0 : index
    %c0_5 = arith.constant 0 : index
    %4 = vector.load %arg4[%c0_4, %c0_5] : memref<8x1xf32, #tpu.memory_space<vmem>>, vector<8x1xf32>
    %5 = vector.broadcast %4 : vector<8x1xf32> to vector<8x128xf32>
    %6 = arith.addf %3, %5 : vector<8x128xf32>
    %cst_6 = arith.constant 0.000000e+00 : f32
    %7 = vector.broadcast %cst_6 : f32 to vector<8x128xf32>
    %8 = arith.subf %7, %6 : vector<8x128xf32>
    %9 = math.exp %8 : vector<8x128xf32>
    %cst_7 = arith.constant 1.000000e+00 : f32
    %10 = vector.broadcast %cst_7 : f32 to vector<8x128xf32>
    %11 = arith.addf %10, %9 : vector<8x128xf32>
    %12 = tpu.reciprocal %11 {approx = true} : vector<8x128xf32> -> vector<8x128xf32>
    %13 = arith.mulf %6, %12 : vector<8x128xf32>
    %c0_8 = arith.constant 0 : index
    %c0_9 = arith.constant 0 : index
    %c0_10 = arith.constant 0 : index
    %14 = vector.load %arg5[%c0_8, %c0_9, %c0_10] : memref<1x8x128xf32, #tpu.memory_space<vmem>>, vector<1x8x128xf32>
    %15 = vector.shape_cast %14 : vector<1x8x128xf32> to vector<8x128xf32>
    %16 = vector.shape_cast %13 : vector<8x128xf32> to vector<1x8x128xf32>
    tpu.vector_store %arg5[%c0_8, %c0_9, %c0_10], %16 {strides = array<i32>} : memref<1x8x128xf32, #tpu.memory_space<vmem>>, vector<1x8x128xf32>,
    return
  }
  func.func @transform_0(%arg0: i32, %arg1: i32) -> (i32, i32, i32) {
    %c0_i32 = arith.constant 0 : i32
    %c0_i32_0 = arith.constant 0 : i32
    return %arg0, %c0_i32, %arg1 : i32, i32, i32
  }
  func.func @transform_1(%arg0: i32, %arg1: i32) -> (i32, i32) {
    %c0_i32 = arith.constant 0 : i32
    %c0_i32_0 = arith.constant 0 : i32
    %c0_i32_1 = arith.constant 0 : i32
    return %c0_i32, %c0_i32_0 : i32, i32
  }
  func.func @transform_2(%arg0: i32, %arg1: i32) -> (i32, i32) {
    %c0_i32 = arith.constant 0 : i32
    %c0_i32_0 = arith.constant 0 : i32
    %c0_i32_1 = arith.constant 0 : i32
    return %c0_i32, %c0_i32_0 : i32, i32
  }
  func.func @transform_3(%arg0: i32, %arg1: i32) -> (i32, i32, i32) {
    %c0_i32 = arith.constant 0 : i32
    %c0_i32_0 = arith.constant 0 : i32
    return %arg0, %c0_i32, %arg1 : i32, i32, i32
  }
}

</mosaic_0001>

<llo_original>
// kernel: focus_forward.1
$region0: #{focus_forward.1}
  #allocation0 [shape = 'u32[]', space=smem, size = 0x4, offset = 0x4, fixed_abs, tag = 'smem constant byte address 0x4 - core index']
  #allocation1 [shape = 'u32[72,128]{1,0:T(1,128)}', space=vmem, size = 0x9000, scoped, tag = 'internal scratch']
  %s0 = inlined_call_operand.vmem [shape: bf16[2,16,128], index: 0, kind: input, shape index: {}]
  %s1 = inlined_call_operand.vmem [shape: bf16[8,16], index: 1, kind: input, shape index: {}]
  %s2 = inlined_call_operand.vmem [shape: f32[8,1], index: 2, kind: input, shape index: {}]
  %s3 = inlined_call_operand.vmem [shape: f32[2,8,128], index: 3, kind: output, shape index: {}]
  %s4 = sld [smem:[#allocation0]]
  $region45: #{focus_forward.1} parent=0
    _
  %s6 = ssub.s32 1, %s4
  %s7 = scalar_select 0, %s6, %s4
  loop: start=0, step=1, limit=4
  $region2: #{focus_forward.1} parent=0 // loop_pre_header
    _
  $region3: #{focus_forward.1} parent=0 // loop_header
    %s9 = sphi 0, %s13
    %p10 = scmp.ge.s32.totalorder %s9, 4
    %s16 = sphi 0, %s28
    %s17 = sphi 0, %s24
    %s18 = sphi 0, %s16
    %s19 = sphi 0, %s17
    %s20 = sphi 0, %s18
    %s21 = sphi 0, %s19
    %s33 = sphi 0, %s35
    %s36 = sphi 0, %s33
    %s37 = sphi 0, %s36
    %s53 = sphi 0, %s37
    %s57 = sphi 0, %s57
    %s59 = sphi 0, %s57
    %s60 = sphi 0, %s59
    %s74 = sphi 0, %s60
    %s78 = sphi 0, %s78
    %s80 = sphi 0, %s78
    %s81 = sphi 0, %s80
    %s95 = sphi 0, %s81
    %s103 = sphi 0, %s105
    %s106 = sphi 0, %s103
    %s107 = sphi 0, %s106
    %s123 = sphi 0, %s107
  $region4: #{focus_forward.1} parent=0 // loop_header_branch
    %12 = sbr.rel (%p10) target = $region8
  $region5: #{focus_forward.1} parent=0 // loop_body
    %s14 = ssub.s32 %s9, 1
    %s15 = ssub.s32 %s9, 2
    %s22 = sadd.s32 1, %s17
    %p23 = scmp.ge.s32.totalorder %s22, 1
    %s24 = scalar_select %p23, 0, %s22
    %s25 = sadd.s32 1, %s16
    %s26 = scalar_select %p23, %s25, %s16
    %p27 = scmp.ge.s32.totalorder %s26, 2
    %s28 = scalar_select %p27, 0, %s26
    %s29 = ssub.s32 %s16, %s28
    %s30 = ssub.s32 %s17, %s24
    %s31 = sor.u32 %s29, %s30
    %p32 = scmp.eq.s32.totalorder %s31, 0
    %s34 = sadd.s32 %s33, 1
    %s35 = scalar_select %p32, %s33, %s34
    %p38 = pneg %p32
    %p39 = scmp.eq.s32.totalorder %s9, 1
    %p40 = por %p38, %p39
    %p41 = scmp.ne.s32.totalorder %s33, %s36
    %p42 = scmp.eq.s32.totalorder %s9, 0
    %p43 = por %p41, %p42
    %p44 = scmp.ne.s32.totalorder %s33, %s36
    %p45 = scmp.eq.s32.totalorder %s14, 1
    %p46 = por %p44, %p45
    %p47 = scmp.ne.s32.totalorder %s36, %s37
    %p48 = scmp.eq.s32.totalorder %s14, 0
    %p49 = por %p47, %p48
    %p50 = scmp.ne.s32.totalorder %s36, %s37
    %p51 = scmp.eq.s32.totalorder %s15, 1
    %p52 = por %p50, %p51
    %p54 = scmp.ne.s32.totalorder %s37, %s53
    %p55 = scmp.eq.s32.totalorder %s15, 0
    %p56 = por %p54, %p55
    %s58 = sadd.s32 %s57, 1
    %p61 = scmp.eq.s32.totalorder %s9, 1
    %p62 = scmp.ne.s32.totalorder %s57, %s59
    %p63 = scmp.eq.s32.totalorder %s9, 0
    %p64 = por %p62, %p63
    %p65 = scmp.ne.s32.totalorder %s57, %s59
    %p66 = scmp.eq.s32.totalorder %s14, 1
    %p67 = por %p65, %p66
    %p68 = scmp.ne.s32.totalorder %s59, %s60
    %p69 = scmp.eq.s32.totalorder %s14, 0
    %p70 = por %p68, %p69
    %p71 = scmp.ne.s32.totalorder %s59, %s60
    %p72 = scmp.eq.s32.totalorder %s15, 1
    %p73 = por %p71, %p72
    %p75 = scmp.ne.s32.totalorder %s60, %s74
    %p76 = scmp.eq.s32.totalorder %s15, 0
    %p77 = por %p75, %p76
    %s79 = sadd.s32 %s78, 1
    %p82 = scmp.eq.s32.totalorder %s9, 1
    %p83 = scmp.ne.s32.totalorder %s78, %s80
    %p84 = scmp.eq.s32.totalorder %s9, 0
    %p85 = por %p83, %p84
    %p86 = scmp.ne.s32.totalorder %s78, %s80
    %p87 = scmp.eq.s32.totalorder %s14, 1
    %p88 = por %p86, %p87
    %p89 = scmp.ne.s32.totalorder %s80, %s81
    %p90 = scmp.eq.s32.totalorder %s14, 0
    %p91 = por %p89, %p90
    %p92 = scmp.ne.s32.totalorder %s80, %s81
    %p93 = scmp.eq.s32.totalorder %s15, 1
    %p94 = por %p92, %p93
    %p96 = scmp.ne.s32.totalorder %s81, %s95
    %p97 = scmp.eq.s32.totalorder %s15, 0
    %p98 = por %p96, %p97
    %s99 = ssub.s32 %s16, %s28
    %s100 = ssub.s32 %s17, %s24
    %s101 = sor.u32 %s99, %s100
    %p102 = scmp.eq.s32.totalorder %s101, 0
    %s104 = sadd.s32 %s103, 1
    %s105 = scalar_select %p102, %s103, %s104
    %p108 = pneg %p102
    %p109 = scmp.eq.s32.totalorder %s9, 1
    %p110 = por %p108, %p109
    %p111 = scmp.ne.s32.totalorder %s103, %s106
    %p112 = scmp.eq.s32.totalorder %s9, 0
    %p113 = por %p111, %p112
    %p114 = scmp.ne.s32.totalorder %s103, %s106
    %p115 = scmp.eq.s32.totalorder %s14, 1
    %p116 = por %p114, %p115
    %p117 = scmp.ne.s32.totalorder %s106, %s107
    %p118 = scmp.eq.s32.totalorder %s14, 0
    %p119 = por %p117, %p118
    %p120 = scmp.ne.s32.totalorder %s106, %s107
    %p121 = scmp.eq.s32.totalorder %s15, 1
    %p122 = por %p120, %p121
    %p124 = scmp.ne.s32.totalorder %s107, %s123
    %p125 = scmp.eq.s32.totalorder %s15, 0
    %p126 = por %p124, %p125
    %p127 = scmp.le.s32.totalorder 1, %s9
    %p128 = scmp.lt.s32.totalorder %s9, 3
    %p129 = pnand %p127, %p128
    %p130 = pneg %p129
    // Predicated region
    $region9: #{focus_forward.1} parent=5 // pred_check
      _
    $region10: #{focus_forward.1} parent=5 // pred_check_branch
      %132 = sbr.rel (%p129) target = $region12
    $region11: #{focus_forward.1} parent=5 // pred_region
      %s133 = ssub.s32 %s9, 1
      // Predicated region
      $region13: #{focus_forward.1} parent=11 // pred_check
        %p134 = pneg %p70
      $region14: #{focus_forward.1} parent=11 // pred_check_branch
        %136 = sbr.rel (%p134) target = $region16
      $region15: #{focus_forward.1} parent=11 // pred_region
        _
      $region16: #{focus_forward.1} parent=11 // pred_fallthru
        _
      // Predicated region
      $region17: #{focus_forward.1} parent=11 // pred_check
        %p137 = pneg %p91
      $region18: #{focus_forward.1} parent=11 // pred_check_branch
        %139 = sbr.rel (%p137) target = $region20
      $region19: #{focus_forward.1} parent=11 // pred_region
        _
      $region20: #{focus_forward.1} parent=11 // pred_fallthru
        _
    $region12: #{focus_forward.1} parent=5 // pred_fallthru
      _
    %p140 = scmp.lt.s32.totalorder %s9, 2
    // Predicated region
    $region21: #{focus_forward.1} parent=5 // pred_check
      %p141 = pneg %p140
    $region22: #{focus_forward.1} parent=5 // pred_check_branch
      %143 = sbr.rel (%p141) target = $region24
    $region23: #{focus_forward.1} parent=5 // pred_region
      // Predicated region
      $region25: #{focus_forward.1} parent=23 // pred_check
        %p144 = pneg %p43
      $region26: #{focus_forward.1} parent=23 // pred_check_branch
        %146 = sbr.rel (%p144) target = $region28
      $region27: #{focus_forward.1} parent=23 // pred_region
        %p147 = scmp.lt.s32.totalorder %s16, 1
        %s148 = scalar_select %p147, %s16, 1
        %p149 = scmp.lt.s32.totalorder %s17, 0
        %s150 = scalar_select %p149, %s17, 0
        %s151 = smul.addr %s148, 2
        %s152 = sadd.s32 %s150, %s151
        %s153 = smul.addr %s152, 4
        %s154 = scalar_lea.vmem %s0, %s153
      $region28: #{focus_forward.1} parent=23 // pred_fallthru
        _
    $region24: #{focus_forward.1} parent=5 // pred_fallthru
      _
    %p155 = scmp.le.s32.totalorder 1, %s9
    %p156 = scmp.lt.s32.totalorder %s9, 3
    %p157 = pnand %p155, %p156
    %p158 = pneg %p157
    // Predicated region
    $region29: #{focus_forward.1} parent=5 // pred_check
      _
    $region30: #{focus_forward.1} parent=5 // pred_check_branch
      %160 = sbr.rel (%p157) target = $region32
    $region31: #{focus_forward.1} parent=5 // pred_region
      %s161 = ssub.s32 %s9, 1
      %p162 = scmp.lt.s32.totalorder %s18, 1
      %s163 = scalar_select %p162, %s18, 1
      %p164 = scmp.lt.s32.totalorder %s19, 0
      %s165 = scalar_select %p164, %s19, 0
      %s166 = smul.addr %s163, 2
      %s167 = sadd.s32 %s165, %s166
      %s168 = smul.addr %s167, 4
      %s169 = scalar_lea.vmem %s0, %s168
      %p170 = pneg %p49
      %p171 = pneg %p46
      %p172 = pneg %p70
      %p173 = pneg %p67
      %p174 = pneg %p91
      %p175 = pneg %p88
      %p176 = pneg %p119
      %p177 = pneg %p116
      %p178 = scmp.lt.s32.totalorder %s18, 1
      %s179 = scalar_select %p178, %s18, 1
      %p180 = scmp.lt.s32.totalorder %s19, 0
      %s181 = scalar_select %p180, %s19, 0
      %s182 = sadd.s32 %s181, %s179
      %s183 = smul.addr %s182, 8
      %s184 = scalar_lea.vmem %s3, %s183
      %p185 = scmp.lt.s32.totalorder %s18, 1
      %s186 = scalar_select %p185, %s18, 1
      %p187 = scmp.lt.s32.totalorder %s19, 0
      %s188 = scalar_select %p187, %s19, 0
      %s189 = smul.addr %s186, 2
      %s190 = sadd.s32 %s188, %s189
      %s191 = smul.addr %s190, 4
      %s192 = scalar_lea.vmem %s0, %s191
      %p193 = scmp.lt.s32.totalorder %s18, 1
      %s194 = scalar_select %p193, %s18, 1
      %p195 = scmp.lt.s32.totalorder %s19, 0
      %s196 = scalar_select %p195, %s19, 0
      %s197 = sadd.s32 %s196, %s194
      %s198 = smul.addr %s197, 8
      %s199 = scalar_lea.vmem %s3, %s198
      %v201 = vld [vmem:[%s1] sm:$0xf]
      %v202 = vld [vmem:[%s192] sm:$0xf]
      %v203 = vld [vmem:[%s192 + $0x4] sm:$0xf]
      %v204 = vld [vmem:[%s2] sm:$0xff]
      %206 = vset.pattern.permute.xlu0 0
      %207 = vperm.xlu0 %206, %v204
      %v208 = vpop.permute.xlu0 %207
      %v212 = vunpack.c.l.b16 %v202
      %v213 = vunpack.c.l.b16 %v203
      %v214 = vpack.c.b16 %v213, %v212
      %vm216 = vcmask 130048
      %v218 = vsel %vm216, %v201, 0
      %220 = vmatpush.bf16.msra.mxu0 0
      %221 = vmatpush.bf16.msra.mxu0 0
      %222 = vmatpush.bf16.msra.mxu0 0
      %223 = vmatpush.bf16.msra.mxu0 0
      %224 = vmatpush.bf16.msra.mxu0 0
      %225 = vmatpush.bf16.msra.mxu0 0
      %226 = vmatpush.bf16.msra.mxu0 0
      %227 = vmatpush.bf16.msra.mxu0 %v214
      %228 = vmatmul.bf16.gmra.mxu0 %v218
      %v229 = vpop.f32.mrf.mxu0
      %v230 = vadd.f32 %v208, %v229
      %v231 = vpop.f32.mrf.mxu0
      %232 = vdwg.mxu0
      %v233 = vsub.f32 0.0, %v230
      %v234 = vmul.f32 %v233, 1.442695
      %v235 = vpow.pop %v234
      %v236 = vadd.f32 %v235, 1.0
      %v237 = vrcp.pop %v236
      %v238 = vmul.f32 %v230, %v237
      %239 = vst [vmem:[%s199] sm:$0xff] %v238
      %p240 = scmp.lt.s32.totalorder %s18, 1
      %s241 = scalar_select %p240, %s18, 1
      %p242 = scmp.lt.s32.totalorder %s19, 0
      %s243 = scalar_select %p242, %s19, 0
      %s244 = sadd.s32 %s243, %s241
      %s245 = smul.addr %s244, 8
      %s246 = scalar_lea.vmem %s3, %s245
      // Predicated region
      $region33: #{focus_forward.1} parent=31 // pred_check
        %p247 = pneg %p116
      $region34: #{focus_forward.1} parent=31 // pred_check_branch
        %249 = sbr.rel (%p247) target = $region36
      $region35: #{focus_forward.1} parent=31 // pred_region
        _
      $region36: #{focus_forward.1} parent=31 // pred_fallthru
        _
    $region32: #{focus_forward.1} parent=5 // pred_fallthru
      _
    %p250 = scmp.le.s32.totalorder 2, %s9
    // Predicated region
    $region37: #{focus_forward.1} parent=5 // pred_check
      %p251 = pneg %p250
    $region38: #{focus_forward.1} parent=5 // pred_check_branch
      %253 = sbr.rel (%p251) target = $region40
    $region39: #{focus_forward.1} parent=5 // pred_region
      %s254 = ssub.s32 %s9, 2
      // Predicated region
      $region41: #{focus_forward.1} parent=39 // pred_check
        %p255 = pneg %p122
      $region42: #{focus_forward.1} parent=39 // pred_check_branch
        %257 = sbr.rel (%p255) target = $region44
      $region43: #{focus_forward.1} parent=39 // pred_region
        %p258 = scmp.lt.s32.totalorder %s20, 1
        %s259 = scalar_select %p258, %s20, 1
        %p260 = scmp.lt.s32.totalorder %s21, 0
        %s261 = scalar_select %p260, %s21, 0
        %s262 = sadd.s32 %s261, %s259
        %s263 = smul.addr %s262, 8
        %s264 = scalar_lea.vmem %s3, %s263
      $region44: #{focus_forward.1} parent=39 // pred_fallthru
        _
    $region40: #{focus_forward.1} parent=5 // pred_fallthru
      _
  $region6: #{focus_forward.1} parent=0 // loop_footer
    %s13 = sadd.s32 1, %s9
  $region7: #{focus_forward.1} parent=0 // loop_footer_branch
    %8 = sbr.rel target = $region3
  $region8: #{focus_forward.1} parent=0 // loop_exit
    _

</llo_original>
